<compile_context>
chip_gen: v5e
topology: v5e:2x2
jax: 0.10.0
libtpu: 0.0.40
codegen_flags: <defaults>
</compile_context>

<pallas_src>
import jax
import jax.numpy as jnp
from jax.experimental import pallas as pl
from jax.experimental.pallas import tpu as pltpu


NUM_CLASSES = 10
H_PAD = 128        # per-network hidden lanes (padded to full lane width)
O_PAD = 128        # per-network output lanes (padded to full lane width)
B_SUBLANE = 16     # bf16 sublane packing granularity for the batch dim


def _round_up(x, m):
    return (x + m - 1) // m * m


def _distill_kernel(x_ref, w1_ref, b1_ref, w2_ref, b2_ref, o_ref):
    """Both networks in one shot.

    x  : [B_pad, D]        bf16
    W1 : [D, 2*H_PAD]      bf16   (student lanes 0..127 | teacher lanes 128..255)
    b1 : [1, 2*H_PAD]      f32
    W2 : [2*H_PAD, 2*O_PAD] bf16  (block-diagonal: no cross-talk between nets)
    b2 : [1, 2*O_PAD]      f32
    out: [B_pad, 2*O_PAD]  f32    (lane-dense)
    """
    # First matmul: bf16 x bf16 -> f32 accumulation on the MXU.
    h = jnp.dot(x_ref[...], w1_ref[...], preferred_element_type=jnp.float32)
    h = jnp.maximum(h + b1_ref[...], 0.0)            # f32 bias + ReLU (VPU)
    # Second matmul: cast h back to bf16 (tiny: B_pad x 256) for the MXU.
    o = jnp.dot(h.astype(jnp.bfloat16), w2_ref[...],
                preferred_element_type=jnp.float32)
    o_ref[...] = o + b2_ref[...]


def distillnet_pallas(x_bf16, w1_cat, b1_cat, w2_cat, b2_cat):
    """Single-step pallas_call running student + teacher fused."""
    B_pad, D = x_bf16.shape
    H2 = w1_cat.shape[1]          # 2 * H_PAD
    O2 = w2_cat.shape[1]          # 2 * O_PAD

    flops = 2 * B_pad * D * H2 + 2 * B_pad * H2 * O2
    bytes_accessed = (
        x_bf16.size * x_bf16.dtype.itemsize
        + w1_cat.size * w1_cat.dtype.itemsize
        + b1_cat.size * b1_cat.dtype.itemsize
        + w2_cat.size * w2_cat.dtype.itemsize
        + b2_cat.size * b2_cat.dtype.itemsize
        + B_pad * O2 * 4)

    vmem = pl.BlockSpec(memory_space=pltpu.MemorySpace.VMEM)
    return pl.pallas_call(
        _distill_kernel,
        out_shape=jax.ShapeDtypeStruct((B_pad, O2), jnp.float32),
        in_specs=[vmem] * 5,
        out_specs=vmem,
        cost_estimate=pl.CostEstimate(
            flops=flops, transcendentals=0, bytes_accessed=bytes_accessed),
        # NOTE: if the real batch grows, add an M grid axis (tile 128/256 rows,
        # "parallel", constant weight index_maps) to amortize the weight DMA.
        # Further bandwidth levers: int8 weights on v5e/v6e, fp8 on v7x.
    )(x_bf16, w1_cat, b1_cat, w2_cat, b2_cat)


def init_mlp_params(key, in_dim, hidden_dim, out_dim, scale=0.02):
    """Lane-padded MLP params: weights bf16, biases f32.

    Zero-padding is exact: padded hidden lanes get zero W1 cols + zero bias
    (ReLU keeps them at 0) and hit zero W2 rows; padded output lanes are
    sliced off by the caller.
    """
    k1, k2, k3, k4 = jax.random.split(key, 4)
    w1 = scale * jax.random.normal(k1, (in_dim, hidden_dim), jnp.float32)
    b1 = scale * jax.random.normal(k2, (1, hidden_dim), jnp.float32)
    w2 = scale * jax.random.normal(k3, (hidden_dim, out_dim), jnp.float32)
    b2 = scale * jax.random.normal(k4, (1, out_dim), jnp.float32)

    w1p = jnp.zeros((in_dim, H_PAD), jnp.float32).at[:, :hidden_dim].set(w1)
    b1p = jnp.zeros((1, H_PAD), jnp.float32).at[:, :hidden_dim].set(b1)
    w2p = jnp.zeros((H_PAD, O_PAD), jnp.float32).at[:hidden_dim, :out_dim].set(w2)
    b2p = jnp.zeros((1, O_PAD), jnp.float32).at[:, :out_dim].set(b2)
    return (w1p.astype(jnp.bfloat16), b1p, w2p.astype(jnp.bfloat16), b2p)


def pack_distill_params(student_params, teacher_params):
    """Concat hidden lanes; block-diagonal W2 so the two nets never mix."""
    w1_s, b1_s, w2_s, b2_s = student_params
    w1_t, b1_t, w2_t, b2_t = teacher_params
    w1_cat = jnp.concatenate([w1_s, w1_t], axis=1)                # [D, 256] bf16
    b1_cat = jnp.concatenate([b1_s, b1_t], axis=1)                # [1, 256] f32
    w2_cat = jnp.zeros((2 * H_PAD, 2 * O_PAD), jnp.bfloat16)
    w2_cat = w2_cat.at[:H_PAD, :O_PAD].set(w2_s)
    w2_cat = w2_cat.at[H_PAD:, O_PAD:].set(w2_t)                  # [256, 256] bf16
    b2_cat = jnp.concatenate([b2_s, b2_t], axis=1)                # [1, 256] f32
    return w1_cat, b1_cat, w2_cat, b2_cat


def distillnet_forward(x_nchw, student_params, teacher_params,
                       num_classes=NUM_CLASSES):
    """DistillNet.forward: return [student_logits, teacher_logits]."""
    B = x_nchw.shape[0]
    x2d = x_nchw.reshape(B, -1)                          # NCHW -> [B, C*H*W]
    D = x2d.shape[1]
    B_pad = _round_up(max(B, 1), B_SUBLANE)
    x_pad = jnp.zeros((B_pad, D), jnp.float32).at[:B].set(x2d)
    x_bf16 = x_pad.astype(jnp.bfloat16)                  # bf16 MXU operand

    # Teacher is frozen (requires_grad=False) -> stop_gradient mirrors intent.
    # TODO(synk): no custom_vjp on this pallas_call, so the student path is
    # not differentiable through the kernel (inference-only forward).
    teacher_params = jax.tree_util.tree_map(jax.lax.stop_gradient, teacher_params)

    w1_cat, b1_cat, w2_cat, b2_cat = pack_distill_params(
        student_params, teacher_params)

    out = distillnet_pallas(x_bf16, w1_cat, b1_cat, w2_cat, b2_cat)
    student_logits = out[:B, :num_classes]
    teacher_logits = out[:B, O_PAD:O_PAD + num_classes]
    return [student_logits, teacher_logits]


if __name__ == "__main__":
    key = jax.random.PRNGKey(0)
    kx, ks, kt = jax.random.split(key, 3)

    # Small shapes consistent with an image-classification distillation setup.
    B, C, H, W = 2, 4, 16, 16
    D = C * H * W                # 1024 flattened features
    STUDENT_HIDDEN = 32
    TEACHER_HIDDEN = 64          # teacher wider than student

    x = jax.random.normal(kx, (B, C, H, W), jnp.float32)
    student_params = init_mlp_params(ks, D, STUDENT_HIDDEN, NUM_CLASSES)
    teacher_params = init_mlp_params(kt, D, TEACHER_HIDDEN, NUM_CLASSES)

    out = distillnet_forward(x, student_params, teacher_params)
    out = jax.block_until_ready(out)

    student_logits, teacher_logits = out
    assert student_logits.shape == (B, NUM_CLASSES)
    assert teacher_logits.shape == (B, NUM_CLASSES)

    # Reference check: plain JAX reproducing the kernel's bf16 operand rounding
    # (bf16 x / h / weights, f32 accumulation).
    x2d_bf = x.reshape(B, -1).astype(jnp.bfloat16).astype(jnp.float32)

    def ref_mlp(x2d, p):
        w1, b1, w2, b2 = p
        h = jnp.maximum(x2d @ w1.astype(jnp.float32) + b1, 0.0)
        h = h.astype(jnp.bfloat16).astype(jnp.float32)
        return (h @ w2.astype(jnp.float32) + b2)[:, :NUM_CLASSES]

    ref_s = ref_mlp(x2d_bf, student_params)
    ref_t = ref_mlp(x2d_bf, teacher_params)
    assert jnp.allclose(student_logits, ref_s, atol=1e-2, rtol=1e-2)
    assert jnp.allclose(teacher_logits, ref_t, atol=1e-2, rtol=1e-2)

    print("KERNEL_OK")
</pallas_src>

<mosaic_0001>
module attributes {stable_mosaic.version = 11 : i64} {
  func.func @_distill_kernel(%arg0: memref<16x1024xbf16, #tpu.memory_space<vmem>>, %arg1: memref<1024x256xbf16, #tpu.memory_space<vmem>>, %arg2: memref<1x256xf32, #tpu.memory_space<vmem>>, %arg3: memref<256x256xbf16, #tpu.memory_space<vmem>>, %arg4: memref<1x256xf32, #tpu.memory_space<vmem>>, %arg5: memref<16x256xf32, #tpu.memory_space<vmem>>) attributes {dimension_semantics = [], scalar_prefetch = 0 : i64, scratch_operands = 0 : i64, tpu.core_type = #tpu.core_type<tc>} {
    %c0 = arith.constant 0 : index
    %c0_0 = arith.constant 0 : index
    %0 = vector.load %arg0[%c0, %c0_0] : memref<16x1024xbf16, #tpu.memory_space<vmem>>, vector<16x1024xbf16>
    %c0_1 = arith.constant 0 : index
    %c0_2 = arith.constant 0 : index
    %1 = vector.load %arg1[%c0_1, %c0_2] : memref<1024x256xbf16, #tpu.memory_space<vmem>>, vector<1024x256xbf16>
    %cst = arith.constant dense<0.000000e+00> : vector<16x256xf32>
    %2 = tpu.matmul %0, %1, %cst {dimension_numbers = #tpu.dot_dimension_numbers<[1], [0], [0], [1], [0, 0, 1, 1], [], []>} : vector<16x1024xbf16>, vector<1024x256xbf16>, vector<16x256xf32> -> vector<16x256xf32>
    %c0_3 = arith.constant 0 : index
    %c0_4 = arith.constant 0 : index
    %3 = vector.load %arg2[%c0_3, %c0_4] : memref<1x256xf32, #tpu.memory_space<vmem>>, vector<1x256xf32>
    %4 = vector.broadcast %3 : vector<1x256xf32> to vector<16x256xf32>
    %5 = arith.addf %2, %4 : vector<16x256xf32>
    %cst_5 = arith.constant 0.000000e+00 : f32
    %6 = vector.broadcast %cst_5 : f32 to vector<16x256xf32>
    %7 = arith.maximumf %5, %6 : vector<16x256xf32>
    %8 = arith.truncf %7 : vector<16x256xf32> to vector<16x256xbf16>
    %c0_6 = arith.constant 0 : index
    %c0_7 = arith.constant 0 : index
    %9 = vector.load %arg3[%c0_6, %c0_7] : memref<256x256xbf16, #tpu.memory_space<vmem>>, vector<256x256xbf16>
    %cst_8 = arith.constant dense<0.000000e+00> : vector<16x256xf32>
    %10 = tpu.matmul %8, %9, %cst_8 {dimension_numbers = #tpu.dot_dimension_numbers<[1], [0], [0], [1], [0, 0, 1, 1], [], []>} : vector<16x256xbf16>, vector<256x256xbf16>, vector<16x256xf32> -> vector<16x256xf32>
    %c0_9 = arith.constant 0 : index
    %c0_10 = arith.constant 0 : index
    %11 = vector.load %arg4[%c0_9, %c0_10] : memref<1x256xf32, #tpu.memory_space<vmem>>, vector<1x256xf32>
    %12 = vector.broadcast %11 : vector<1x256xf32> to vector<16x256xf32>
    %13 = arith.addf %10, %12 : vector<16x256xf32>
    %c0_11 = arith.constant 0 : index
    %c0_12 = arith.constant 0 : index
    %14 = vector.load %arg5[%c0_11, %c0_12] : memref<16x256xf32, #tpu.memory_space<vmem>>, vector<16x256xf32>
    tpu.vector_store %arg5[%c0_11, %c0_12], %13 {strides = array<i32>} : memref<16x256xf32, #tpu.memory_space<vmem>>, vector<16x256xf32>,
    return
  }
}

</mosaic_0001>

<llo_original>
// kernel: tpu_custom_call.1
$region0: #{tpu_custom_call.1}
  #allocation0 [shape = 'u32[]', space=smem, size = 0x4, offset = 0x4, fixed_abs, tag = 'smem constant byte address 0x4 - core index']
  #allocation1 [shape = 'u32[72,128]{1,0:T(1,128)}', space=vmem, size = 0x9000, scoped, tag = 'internal scratch']
  %s0 = inlined_call_operand.hbm [shape: bf16[16,1024], index: 0, kind: input, shape index: {}]
  %s1 = inlined_call_operand.hbm [shape: bf16[1024,256], index: 1, kind: input, shape index: {}]
  %s2 = inlined_call_operand.hbm [shape: f32[1,256], index: 2, kind: input, shape index: {}]
  %s3 = inlined_call_operand.hbm [shape: bf16[256,256], index: 3, kind: input, shape index: {}]
  %s4 = inlined_call_operand.vmem [shape: f32[1,256], index: 4, kind: input, shape index: {}]
  %s5 = inlined_call_operand.hbm [shape: f32[16,256], index: 5, kind: output, shape index: {}]
  %s6 = sld [smem:[#allocation0]]
  $region46: #{tpu_custom_call.1} parent=0
    _
  %s8 = ssub.s32 1, %s6
  %s9 = scalar_select 0, %s8, %s6
  $region1: #{tpu_custom_call.1} parent=0
    #allocation2 [shape = 'u8[32768]{0}', space=vmem, size = 0x8000, scoped, tag = 'input window, operand 0, single buffered']
    #allocation3 [shape = 's32[1]{0}', space=sflag, size = 0x4, scoped, tag = 'scoped memory for tpu_custom_call.1']
    #allocation4 [shape = 's32[1]{0}', space=sflag, size = 0x4, scoped, tag = 'scoped memory for tpu_custom_call.1']
    #allocation5 [shape = 'u8[524288]{0}', space=vmem, size = 0x80000, scoped, tag = 'input window, operand 1, single buffered']
    #allocation6 [shape = 's32[1]{0}', space=sflag, size = 0x4, scoped, tag = 'scoped memory for tpu_custom_call.1']
    #allocation7 [shape = 'u8[1024]{0}', space=vmem, size = 0x400, scoped, tag = 'input window, operand 2, single buffered']
    #allocation8 [shape = 'u8[131072]{0}', space=vmem, size = 0x20000, scoped, tag = 'input window, operand 3, single buffered']
    #allocation9 [shape = 's32[1]{0}', space=sflag, size = 0x4, scoped, tag = 'scoped memory for tpu_custom_call.1']
    #allocation10 [shape = 'u8[16384]{0}', space=vmem, size = 0x4000, scoped, tag = 'output window, operand 0, single buffered']
    %10 = vsyncpa [#allocation3], 0
    %11 = vsyncpa [#allocation6], 0
    %12 = vsyncpa [#allocation9], 0
    %13 = vsyncpa [#allocation4], 0
    // Predicated region
    $region2: #{tpu_custom_call.1} parent=1 // pred_check
      _
    $region3: #{tpu_custom_call.1} parent=1 // pred_check_branch
      %15 = sbr.rel (0) target = $region5
    $region4: #{tpu_custom_call.1} parent=1 // pred_region
      %17 = vsyncadd [#allocation3], 0
      %s18 = sshll.u32 %s0, 4
      %s19 = int_to_ptr.hbm [resolvable:$true] %s18
      %s20 = sshll.u32 [#allocation2], 4
      %s21 = int_to_ptr.vmem [resolvable:$true] %s20
      %26 = dma.hbm_to_vmem [thread:$0]  %s19, 1024, %s21, [#allocation3], 512, 512, 32
    $region5: #{tpu_custom_call.1} parent=1 // pred_fallthru
      _
    // Predicated region
    $region6: #{tpu_custom_call.1} parent=1 // pred_check
      _
    $region7: #{tpu_custom_call.1} parent=1 // pred_check_branch
      %28 = sbr.rel (0) target = $region9
    $region8: #{tpu_custom_call.1} parent=1 // pred_region
      %30 = vsyncadd [#allocation6], 0
      %s31 = sshll.u32 %s1, 4
      %s32 = int_to_ptr.hbm [resolvable:$true] %s31
      %s33 = sshll.u32 [#allocation5], 4
      %s34 = int_to_ptr.vmem [resolvable:$true] %s33
      %39 = dma.hbm_to_vmem [thread:$0]  %s32, 16384, %s34, [#allocation6], 128, 128, 8
    $region9: #{tpu_custom_call.1} parent=1 // pred_fallthru
      _
    // Predicated region
    $region10: #{tpu_custom_call.1} parent=1 // pred_check
      _
    $region11: #{tpu_custom_call.1} parent=1 // pred_check_branch
      %41 = sbr.rel (0) target = $region13
    $region12: #{tpu_custom_call.1} parent=1 // pred_region
      %43 = vsyncadd [#allocation6], 0
      %s45 = sshll.u32 %s2, 4
      %s46 = int_to_ptr.hbm [resolvable:$true] %s45
      %s47 = sshll.u32 [#allocation7], 4
      %s48 = int_to_ptr.vmem [resolvable:$true] %s47
      %50 = dma.hbm_to_vmem [thread:$0]  %s46, 32, %s48, [#allocation6]
    $region13: #{tpu_custom_call.1} parent=1 // pred_fallthru
      _
    // Predicated region
    $region14: #{tpu_custom_call.1} parent=1 // pred_check
      _
    $region15: #{tpu_custom_call.1} parent=1 // pred_check_branch
      %52 = sbr.rel (0) target = $region17
    $region16: #{tpu_custom_call.1} parent=1 // pred_region
      %54 = vsyncadd [#allocation9], 0
      %s55 = sshll.u32 %s3, 4
      %s56 = int_to_ptr.hbm [resolvable:$true] %s55
      %s57 = sshll.u32 [#allocation8], 4
      %s58 = int_to_ptr.vmem [resolvable:$true] %s57
      %63 = dma.hbm_to_vmem [thread:$0]  %s56, 4096, %s58, [#allocation9], 128, 128, 8
    $region17: #{tpu_custom_call.1} parent=1 // pred_fallthru
      _
    // Predicated region
    $region18: #{tpu_custom_call.1} parent=1 // pred_check
      _
    $region19: #{tpu_custom_call.1} parent=1 // pred_check_branch
      %65 = sbr.rel (0) target = $region21
    $region20: #{tpu_custom_call.1} parent=1 // pred_region
      _
    $region21: #{tpu_custom_call.1} parent=1 // pred_fallthru
      _
    // Predicated region
    $region22: #{tpu_custom_call.1} parent=1 // pred_check
      _
    $region23: #{tpu_custom_call.1} parent=1 // pred_check_branch
      %67 = sbr.rel (0) target = $region25
    $region24: #{tpu_custom_call.1} parent=1 // pred_region
      %69 = dma.done [#allocation3], 1024
    $region25: #{tpu_custom_call.1} parent=1 // pred_fallthru
      _
    // Predicated region
    $region26: #{tpu_custom_call.1} parent=1 // pred_check
      _
    $region27: #{tpu_custom_call.1} parent=1 // pred_check_branch
      %71 = sbr.rel (0) target = $region29
    $region28: #{tpu_custom_call.1} parent=1 // pred_region
      %73 = dma.done [#allocation6], 16384
    $region29: #{tpu_custom_call.1} parent=1 // pred_fallthru
      _
    // Predicated region
    $region30: #{tpu_custom_call.1} parent=1 // pred_check
      _
    $region31: #{tpu_custom_call.1} parent=1 // pred_check_branch
      %75 = sbr.rel (0) target = $region33
    $region32: #{tpu_custom_call.1} parent=1 // pred_region
      %77 = dma.done [#allocation6], 32
    $region33: #{tpu_custom_call.1} parent=1 // pred_fallthru
      _
    // Predicated region
    $region34: #{tpu_custom_call.1} parent=1 // pred_check
      _
    $region35: #{tpu_custom_call.1} parent=1 // pred_check_branch
      %79 = sbr.rel (0) target = $region37
    $region36: #{tpu_custom_call.1} parent=1 // pred_region
      %81 = dma.done [#allocation9], 4096
    $region37: #{tpu_custom_call.1} parent=1 // pred_fallthru
      _
    %v82 = vld [vmem:[#allocation2] sm:$0xff]
    %v83 = vld [vmem:[#allocation2 + $0x8] sm:$0xff]
    %v84 = vld [vmem:[#allocation2 + $0x10] sm:$0xff]
    %v85 = vld [vmem:[#allocation2 + $0x18] sm:$0xff]
    %v86 = vld [vmem:[#allocation2 + $0x20] sm:$0xff]
    %v87 = vld [vmem:[#allocation2 + $0x28] sm:$0xff]
    %v88 = vld [vmem:[#allocation2 + $0x30] sm:$0xff]
    %v89 = vld [vmem:[#allocation2 + $0x38] sm:$0xff]
    %v90 = vld [vmem:[#allocation5] sm:$0xff]
    %v91 = vld [vmem:[#allocation5 + $0x8] sm:$0xff]
    %v92 = vld [vmem:[#allocation5 + $0x10] sm:$0xff]
    %v93 = vld [vmem:[#allocation5 + $0x18] sm:$0xff]
    %v94 = vld [vmem:[#allocation5 + $0x20] sm:$0xff]
    %v95 = vld [vmem:[#allocation5 + $0x28] sm:$0xff]
    %v96 = vld [vmem:[#allocation5 + $0x30] sm:$0xff]
    %v97 = vld [vmem:[#allocation5 + $0x38] sm:$0xff]
    %v98 = vld [vmem:[#allocation5 + $0x40] sm:$0xff]
    %v99 = vld [vmem:[#allocation5 + $0x48] sm:$0xff]
    %v100 = vld [vmem:[#allocation5 + $0x50] sm:$0xff]
    %v101 = vld [vmem:[#allocation5 + $0x58] sm:$0xff]
    %v102 = vld [vmem:[#allocation5 + $0x60] sm:$0xff]
    %v103 = vld [vmem:[#allocation5 + $0x68] sm:$0xff]
    %v104 = vld [vmem:[#allocation5 + $0x70] sm:$0xff]
    %v105 = vld [vmem:[#allocation5 + $0x78] sm:$0xff]
    %v106 = vld [vmem:[#allocation5 + $0x80] sm:$0xff]
    %v107 = vld [vmem:[#allocation5 + $0x88] sm:$0xff]
    %v108 = vld [vmem:[#allocation5 + $0x90] sm:$0xff]
    %v109 = vld [vmem:[#allocation5 + $0x98] sm:$0xff]
    %v110 = vld [vmem:[#allocation5 + $0xa0] sm:$0xff]
    %v111 = vld [vmem:[#allocation5 + $0xa8] sm:$0xff]
    %v112 = vld [vmem:[#allocation5 + $0xb0] sm:$0xff]
    %v113 = vld [vmem:[#allocation5 + $0xb8] sm:$0xff]
    %v114 = vld [vmem:[#allocation5 + $0xc0] sm:$0xff]
    %v115 = vld [vmem:[#allocation5 + $0xc8] sm:$0xff]
    %v116 = vld [vmem:[#allocation5 + $0xd0] sm:$0xff]
    %v117 = vld [vmem:[#allocation5 + $0xd8] sm:$0xff]
    %v118 = vld [vmem:[#allocation5 + $0xe0] sm:$0xff]
    %v119 = vld [vmem:[#allocation5 + $0xe8] sm:$0xff]
    %v120 = vld [vmem:[#allocation5 + $0xf0] sm:$0xff]
    %v121 = vld [vmem:[#allocation5 + $0xf8] sm:$0xff]
    %v122 = vld [vmem:[#allocation5 + $0x100] sm:$0xff]
    %v123 = vld [vmem:[#allocation5 + $0x108] sm:$0xff]
    %v124 = vld [vmem:[#allocation5 + $0x110] sm:$0xff]
    %v125 = vld [vmem:[#allocation5 + $0x118] sm:$0xff]
    %v126 = vld [vmem:[#allocation5 + $0x120] sm:$0xff]
    %v127 = vld [vmem:[#allocation5 + $0x128] sm:$0xff]
    %v128 = vld [vmem:[#allocation5 + $0x130] sm:$0xff]
    %v129 = vld [vmem:[#allocation5 + $0x138] sm:$0xff]
    %v130 = vld [vmem:[#allocation5 + $0x140] sm:$0xff]
    %v131 = vld [vmem:[#allocation5 + $0x148] sm:$0xff]
    %v132 = vld [vmem:[#allocation5 + $0x150] sm:$0xff]
    %v133 = vld [vmem:[#allocation5 + $0x158] sm:$0xff]
    %v134 = vld [vmem:[#allocation5 + $0x160] sm:$0xff]
    %v135 = vld [vmem:[#allocation5 + $0x168] sm:$0xff]
    %v136 = vld [vmem:[#allocation5 + $0x170] sm:$0xff]
    %v137 = vld [vmem:[#allocation5 + $0x178] sm:$0xff]
    %v138 = vld [vmem:[#allocation5 + $0x180] sm:$0xff]
    %v139 = vld [vmem:[#allocation5 + $0x188] sm:$0xff]
    %v140 = vld [vmem:[#allocation5 + $0x190] sm:$0xff]
    %v141 = vld [vmem:[#allocation5 + $0x198] sm:$0xff]
    %v142 = vld [vmem:[#allocation5 + $0x1a0] sm:$0xff]
    %v143 = vld [vmem:[#allocation5 + $0x1a8] sm:$0xff]
    %v144 = vld [vmem:[#allocation5 + $0x1b0] sm:$0xff]
    %v145 = vld [vmem:[#allocation5 + $0x1b8] sm:$0xff]
    %v146 = vld [vmem:[#allocation5 + $0x1c0] sm:$0xff]
    %v147 = vld [vmem:[#allocation5 + $0x1c8] sm:$0xff]
    %v148 = vld [vmem:[#allocation5 + $0x1d0] sm:$0xff]
    %v149 = vld [vmem:[#allocation5 + $0x1d8] sm:$0xff]
    %v150 = vld [vmem:[#allocation5 + $0x1e0] sm:$0xff]
    %v151 = vld [vmem:[#allocation5 + $0x1e8] sm:$0xff]
    %v152 = vld [vmem:[#allocation5 + $0x1f0] sm:$0xff]
    %v153 = vld [vmem:[#allocation5 + $0x1f8] sm:$0xff]
    %v154 = vld [vmem:[#allocation5 + $0x200] sm:$0xff]
    %v155 = vld [vmem:[#allocation5 + $0x208] sm:$0xff]
    %v156 = vld [vmem:[#allocation5 + $0x210] sm:$0xff]
    %v157 = vld [vmem:[#allocation5 + $0x218] sm:$0xff]
    %v158 = vld [vmem:[#allocation5 + $0x220] sm:$0xff]
    %v159 = vld [vmem:[#allocation5 + $0x228] sm:$0xff]
    %v160 = vld [vmem:[#allocation5 + $0x230] sm:$0xff]
    %v161 = vld [vmem:[#allocation5 + $0x238] sm:$0xff]
    %v162 = vld [vmem:[#allocation5 + $0x240] sm:$0xff]
    %v163 = vld [vmem:[#allocation5 + $0x248] sm:$0xff]
    %v164 = vld [vmem:[#allocation5 + $0x250] sm:$0xff]
    %v165 = vld [vmem:[#allocation5 + $0x258] sm:$0xff]
    %v166 = vld [vmem:[#allocation5 + $0x260] sm:$0xff]
    %v167 = vld [vmem:[#allocation5 + $0x268] sm:$0xff]
    %v168 = vld [vmem:[#allocation5 + $0x270] sm:$0xff]
    %v169 = vld [vmem:[#allocation5 + $0x278] sm:$0xff]
    %v170 = vld [vmem:[#allocation5 + $0x280] sm:$0xff]
    %v171 = vld [vmem:[#allocation5 + $0x288] sm:$0xff]
    %v172 = vld [vmem:[#allocation5 + $0x290] sm:$0xff]
    %v173 = vld [vmem:[#allocation5 + $0x298] sm:$0xff]
    %v174 = vld [vmem:[#allocation5 + $0x2a0] sm:$0xff]
    %v175 = vld [vmem:[#allocation5 + $0x2a8] sm:$0xff]
    %v176 = vld [vmem:[#allocation5 + $0x2b0] sm:$0xff]
    %v177 = vld [vmem:[#allocation5 + $0x2b8] sm:$0xff]
    %v178 = vld [vmem:[#allocation5 + $0x2c0] sm:$0xff]
    %v179 = vld [vmem:[#allocation5 + $0x2c8] sm:$0xff]
    %v180 = vld [vmem:[#allocation5 + $0x2d0] sm:$0xff]
    %v181 = vld [vmem:[#allocation5 + $0x2d8] sm:$0xff]
    %v182 = vld [vmem:[#allocation5 + $0x2e0] sm:$0xff]
    %v183 = vld [vmem:[#allocation5 + $0x2e8] sm:$0xff]
    %v184 = vld [vmem:[#allocation5 + $0x2f0] sm:$0xff]
    %v185 = vld [vmem:[#allocation5 + $0x2f8] sm:$0xff]
    %v186 = vld [vmem:[#allocation5 + $0x300] sm:$0xff]
    %v187 = vld [vmem:[#allocation5 + $0x308] sm:$0xff]
    %v188 = vld [vmem:[#allocation5 + $0x310] sm:$0xff]
    %v189 = vld [vmem:[#allocation5 + $0x318] sm:$0xff]
    %v190 = vld [vmem:[#allocation5 + $0x320] sm:$0xff]
    %v191 = vld [vmem:[#allocation5 + $0x328] sm:$0xff]
    %v192 = vld [vmem:[#allocation5 + $0x330] sm:$0xff]
    %v193 = vld [vmem:[#allocation5 + $0x338] sm:$0xff]
    %v194 = vld [vmem:[#allocation5 + $0x340] sm:$0xff]
    %v195 = vld [vmem:[#allocation5 + $0x348] sm:$0xff]
    %v196 = vld [vmem:[#allocation5 + $0x350] sm:$0xff]
    %v197 = vld [vmem:[#allocation5 + $0x358] sm:$0xff]
    %v198 = vld [vmem:[#allocation5 + $0x360] sm:$0xff]
    %v199 = vld [vmem:[#allocation5 + $0x368] sm:$0xff]
    %v200 = vld [vmem:[#allocation5 + $0x370] sm:$0xff]
    %v201 = vld [vmem:[#allocation5 + $0x378] sm:$0xff]
    %v202 = vld [vmem:[#allocation5 + $0x380] sm:$0xff]
    %v203 = vld [vmem:[#allocation5 + $0x388] sm:$0xff]
    %v204 = vld [vmem:[#allocation5 + $0x390] sm:$0xff]
    %v205 = vld [vmem:[#allocation5 + $0x398] sm:$0xff]
    %v206 = vld [vmem:[#allocation5 + $0x3a0] sm:$0xff]
    %v207 = vld [vmem:[#allocation5 + $0x3a8] sm:$0xff]
    %v208 = vld [vmem:[#allocation5 + $0x3b0] sm:$0xff]
    %v209 = vld [vmem:[#allocation5 + $0x3b8] sm:$0xff]
    %v210 = vld [vmem:[#allocation5 + $0x3c0] sm:$0xff]
    %v211 = vld [vmem:[#allocation5 + $0x3c8] sm:$0xff]
    %v212 = vld [vmem:[#allocation5 + $0x3d0] sm:$0xff]
    %v213 = vld [vmem:[#allocation5 + $0x3d8] sm:$0xff]
    %v214 = vld [vmem:[#allocation5 + $0x3e0] sm:$0xff]
    %v215 = vld [vmem:[#allocation5 + $0x3e8] sm:$0xff]
    %v216 = vld [vmem:[#allocation5 + $0x3f0] sm:$0xff]
    %v217 = vld [vmem:[#allocation5 + $0x3f8] sm:$0xff]
    %v218 = vld [vmem:[#allocation7] sm:$0x3]
    %v220 = vperm.slane %v218, 0
    %v221 = vperm.slane %v218, 1
    %v232 = vunpack.c.l.b16 %v82
    %v233 = vunpack.c.h.b16 %v82
    %v234 = vunpack.c.l.b16 %v83
    %v235 = vunpack.c.h.b16 %v83
    %v236 = vunpack.c.l.b16 %v84
    %v237 = vunpack.c.h.b16 %v84
    %v238 = vunpack.c.l.b16 %v85
    %v239 = vunpack.c.h.b16 %v85
    %v240 = vunpack.c.l.b16 %v86
    %v241 = vunpack.c.h.b16 %v86
    %v242 = vunpack.c.l.b16 %v87
    %v243 = vunpack.c.h.b16 %v87
    %v244 = vunpack.c.l.b16 %v88
    %v245 = vunpack.c.h.b16 %v88
    %v246 = vunpack.c.l.b16 %v89
    %v247 = vunpack.c.h.b16 %v89
    %v248 = vpack.c.b16 %v240, %v232
    %v249 = vpack.c.b16 %v241, %v233
    %v250 = vpack.c.b16 %v242, %v234
    %v251 = vpack.c.b16 %v243, %v235
    %v252 = vpack.c.b16 %v244, %v236
    %v253 = vpack.c.b16 %v245, %v237
    %v254 = vpack.c.b16 %v246, %v238
    %v255 = vpack.c.b16 %v247, %v239
    %v392 = vunpack.c.l.b16 %v90
    %v393 = vunpack.c.h.b16 %v90
    %v394 = vunpack.c.l.b16 %v91
    %v395 = vunpack.c.h.b16 %v91
    %v396 = vunpack.c.l.b16 %v92
    %v397 = vunpack.c.h.b16 %v92
    %v398 = vunpack.c.l.b16 %v93
    %v399 = vunpack.c.h.b16 %v93
    %v400 = vunpack.c.l.b16 %v94
    %v401 = vunpack.c.h.b16 %v94
    %v402 = vunpack.c.l.b16 %v95
    %v403 = vunpack.c.h.b16 %v95
    %v404 = vunpack.c.l.b16 %v96
    %v405 = vunpack.c.h.b16 %v96
    %v406 = vunpack.c.l.b16 %v97
    %v407 = vunpack.c.h.b16 %v97
    %v408 = vunpack.c.l.b16 %v98
    %v409 = vunpack.c.h.b16 %v98
    %v410 = vunpack.c.l.b16 %v99
    %v411 = vunpack.c.h.b16 %v99
    %v412 = vunpack.c.l.b16 %v100
    %v413 = vunpack.c.h.b16 %v100
    %v414 = vunpack.c.l.b16 %v101
    %v415 = vunpack.c.h.b16 %v101
    %v416 = vunpack.c.l.b16 %v102
    %v417 = vunpack.c.h.b16 %v102
    %v418 = vunpack.c.l.b16 %v103
    %v419 = vunpack.c.h.b16 %v103
    %v420 = vunpack.c.l.b16 %v104
    %v421 = vunpack.c.h.b16 %v104
    %v422 = vunpack.c.l.b16 %v105
    %v423 = vunpack.c.h.b16 %v105
    %v424 = vunpack.c.l.b16 %v106
    %v425 = vunpack.c.h.b16 %v106
    %v426 = vunpack.c.l.b16 %v107
    %v427 = vunpack.c.h.b16 %v107
    %v428 = vunpack.c.l.b16 %v108
    %v429 = vunpack.c.h.b16 %v108
    %v430 = vunpack.c.l.b16 %v109
    %v431 = vunpack.c.h.b16 %v109
    %v432 = vunpack.c.l.b16 %v110
    %v433 = vunpack.c.h.b16 %v110
    %v434 = vunpack.c.l.b16 %v111
    %v435 = vunpack.c.h.b16 %v111
    %v436 = vunpack.c.l.b16 %v112
    %v437 = vunpack.c.h.b16 %v112
    %v438 = vunpack.c.l.b16 %v113
    %v439 = vunpack.c.h.b16 %v113
    %v440 = vunpack.c.l.b16 %v114
    %v441 = vunpack.c.h.b16 %v114
    %v442 = vunpack.c.l.b16 %v115
    %v443 = vunpack.c.h.b16 %v115
    %v444 = vunpack.c.l.b16 %v116
    %v445 = vunpack.c.h.b16 %v116
    %v446 = vunpack.c.l.b16 %v117
    %v447 = vunpack.c.h.b16 %v117
    %v448 = vunpack.c.l.b16 %v118
    %v449 = vunpack.c.h.b16 %v118
    %v450 = vunpack.c.l.b16 %v119
    %v451 = vunpack.c.h.b16 %v119
    %v452 = vunpack.c.l.b16 %v120
    %v453 = vunpack.c.h.b16 %v120
    %v454 = vunpack.c.l.b16 %v121
    %v455 = vunpack.c.h.b16 %v121
    %v456 = vunpack.c.l.b16 %v122
    %v457 = vunpack.c.h.b16 %v122
    %v458 = vunpack.c.l.b16 %v123
    %v459 = vunpack.c.h.b16 %v123
    %v460 = vunpack.c.l.b16 %v124
    %v461 = vunpack.c.h.b16 %v124
    %v462 = vunpack.c.l.b16 %v125
    %v463 = vunpack.c.h.b16 %v125
    %v464 = vunpack.c.l.b16 %v126
    %v465 = vunpack.c.h.b16 %v126
    %v466 = vunpack.c.l.b16 %v127
    %v467 = vunpack.c.h.b16 %v127
    %v468 = vunpack.c.l.b16 %v128
    %v469 = vunpack.c.h.b16 %v128
    %v470 = vunpack.c.l.b16 %v129
    %v471 = vunpack.c.h.b16 %v129
    %v472 = vunpack.c.l.b16 %v130
    %v473 = vunpack.c.h.b16 %v130
    %v474 = vunpack.c.l.b16 %v131
    %v475 = vunpack.c.h.b16 %v131
    %v476 = vunpack.c.l.b16 %v132
    %v477 = vunpack.c.h.b16 %v132
    %v478 = vunpack.c.l.b16 %v133
    %v479 = vunpack.c.h.b16 %v133
    %v480 = vunpack.c.l.b16 %v134
    %v481 = vunpack.c.h.b16 %v134
    %v482 = vunpack.c.l.b16 %v135
    %v483 = vunpack.c.h.b16 %v135
    %v484 = vunpack.c.l.b16 %v136
    %v485 = vunpack.c.h.b16 %v136
    %v486 = vunpack.c.l.b16 %v137
    %v487 = vunpack.c.h.b16 %v137
    %v488 = vunpack.c.l.b16 %v138
    %v489 = vunpack.c.h.b16 %v138
    %v490 = vunpack.c.l.b16 %v139
    %v491 = vunpack.c.h.b16 %v139
    %v492 = vunpack.c.l.b16 %v140
    %v493 = vunpack.c.h.b16 %v140
    %v494 = vunpack.c.l.b16 %v141
    %v495 = vunpack.c.h.b16 %v141
    %v496 = vunpack.c.l.b16 %v142
    %v497 = vunpack.c.h.b16 %v142
    %v498 = vunpack.c.l.b16 %v143
    %v499 = vunpack.c.h.b16 %v143
    %v500 = vunpack.c.l.b16 %v144
    %v501 = vunpack.c.h.b16 %v144
    %v502 = vunpack.c.l.b16 %v145
    %v503 = vunpack.c.h.b16 %v145
    %v504 = vunpack.c.l.b16 %v146
    %v505 = vunpack.c.h.b16 %v146
    %v506 = vunpack.c.l.b16 %v147
    %v507 = vunpack.c.h.b16 %v147
    %v508 = vunpack.c.l.b16 %v148
    %v509 = vunpack.c.h.b16 %v148
    %v510 = vunpack.c.l.b16 %v149
    %v511 = vunpack.c.h.b16 %v149
    %v512 = vunpack.c.l.b16 %v150
    %v513 = vunpack.c.h.b16 %v150
    %v514 = vunpack.c.l.b16 %v151
    %v515 = vunpack.c.h.b16 %v151
    %v516 = vunpack.c.l.b16 %v152
    %v517 = vunpack.c.h.b16 %v152
    %v518 = vunpack.c.l.b16 %v153
    %v519 = vunpack.c.h.b16 %v153
    %v520 = vunpack.c.l.b16 %v154
    %v521 = vunpack.c.h.b16 %v154
    %v522 = vunpack.c.l.b16 %v155
    %v523 = vunpack.c.h.b16 %v155
    %v524 = vunpack.c.l.b16 %v156
    %v525 = vunpack.c.h.b16 %v156
    %v526 = vunpack.c.l.b16 %v157
    %v527 = vunpack.c.h.b16 %v157
    %v528 = vunpack.c.l.b16 %v158
    %v529 = vunpack.c.h.b16 %v158
    %v530 = vunpack.c.l.b16 %v159
    %v531 = vunpack.c.h.b16 %v159
    %v532 = vunpack.c.l.b16 %v160
    %v533 = vunpack.c.h.b16 %v160
    %v534 = vunpack.c.l.b16 %v161
    %v535 = vunpack.c.h.b16 %v161
    %v536 = vunpack.c.l.b16 %v162
    %v537 = vunpack.c.h.b16 %v162
    %v538 = vunpack.c.l.b16 %v163
    %v539 = vunpack.c.h.b16 %v163
    %v540 = vunpack.c.l.b16 %v164
    %v541 = vunpack.c.h.b16 %v164
    %v542 = vunpack.c.l.b16 %v165
    %v543 = vunpack.c.h.b16 %v165
    %v544 = vunpack.c.l.b16 %v166
    %v545 = vunpack.c.h.b16 %v166
    %v546 = vunpack.c.l.b16 %v167
    %v547 = vunpack.c.h.b16 %v167
    %v548 = vunpack.c.l.b16 %v168
    %v549 = vunpack.c.h.b16 %v168
    %v550 = vunpack.c.l.b16 %v169
    %v551 = vunpack.c.h.b16 %v169
    %v552 = vunpack.c.l.b16 %v170
    %v553 = vunpack.c.h.b16 %v170
    %v554 = vunpack.c.l.b16 %v171
    %v555 = vunpack.c.h.b16 %v171
    %v556 = vunpack.c.l.b16 %v172
    %v557 = vunpack.c.h.b16 %v172
    %v558 = vunpack.c.l.b16 %v173
    %v559 = vunpack.c.h.b16 %v173
    %v560 = vunpack.c.l.b16 %v174
    %v561 = vunpack.c.h.b16 %v174
    %v562 = vunpack.c.l.b16 %v175
    %v563 = vunpack.c.h.b16 %v175
    %v564 = vunpack.c.l.b16 %v176
    %v565 = vunpack.c.h.b16 %v176
    %v566 = vunpack.c.l.b16 %v177
    %v567 = vunpack.c.h.b16 %v177
    %v568 = vunpack.c.l.b16 %v178
    %v569 = vunpack.c.h.b16 %v178
    %v570 = vunpack.c.l.b16 %v179
    %v571 = vunpack.c.h.b16 %v179
    %v572 = vunpack.c.l.b16 %v180
    %v573 = vunpack.c.h.b16 %v180
    %v574 = vunpack.c.l.b16 %v181
    %v575 = vunpack.c.h.b16 %v181
    %v576 = vunpack.c.l.b16 %v182
    %v577 = vunpack.c.h.b16 %v182
    %v578 = vunpack.c.l.b16 %v183
    %v579 = vunpack.c.h.b16 %v183
    %v580 = vunpack.c.l.b16 %v184
    %v581 = vunpack.c.h.b16 %v184
    %v582 = vunpack.c.l.b16 %v185
    %v583 = vunpack.c.h.b16 %v185
    %v584 = vunpack.c.l.b16 %v186
    %v585 = vunpack.c.h.b16 %v186
    %v586 = vunpack.c.l.b16 %v187
    %v587 = vunpack.c.h.b16 %v187
    %v588 = vunpack.c.l.b16 %v188
    %v589 = vunpack.c.h.b16 %v188
    %v590 = vunpack.c.l.b16 %v189
    %v591 = vunpack.c.h.b16 %v189
    %v592 = vunpack.c.l.b16 %v190
    %v593 = vunpack.c.h.b16 %v190
    %v594 = vunpack.c.l.b16 %v191
    %v595 = vunpack.c.h.b16 %v191
    %v596 = vunpack.c.l.b16 %v192
    %v597 = vunpack.c.h.b16 %v192
    %v598 = vunpack.c.l.b16 %v193
    %v599 = vunpack.c.h.b16 %v193
    %v600 = vunpack.c.l.b16 %v194
    %v601 = vunpack.c.h.b16 %v194
    %v602 = vunpack.c.l.b16 %v195
    %v603 = vunpack.c.h.b16 %v195
    %v604 = vunpack.c.l.b16 %v196
    %v605 = vunpack.c.h.b16 %v196
    %v606 = vunpack.c.l.b16 %v197
    %v607 = vunpack.c.h.b16 %v197
    %v608 = vunpack.c.l.b16 %v198
    %v609 = vunpack.c.h.b16 %v198
    %v610 = vunpack.c.l.b16 %v199
    %v611 = vunpack.c.h.b16 %v199
    %v612 = vunpack.c.l.b16 %v200
    %v613 = vunpack.c.h.b16 %v200
    %v614 = vunpack.c.l.b16 %v201
    %v615 = vunpack.c.h.b16 %v201
    %v616 = vunpack.c.l.b16 %v202
    %v617 = vunpack.c.h.b16 %v202
    %v618 = vunpack.c.l.b16 %v203
    %v619 = vunpack.c.h.b16 %v203
    %v620 = vunpack.c.l.b16 %v204
    %v621 = vunpack.c.h.b16 %v204
    %v622 = vunpack.c.l.b16 %v205
    %v623 = vunpack.c.h.b16 %v205
    %v624 = vunpack.c.l.b16 %v206
    %v625 = vunpack.c.h.b16 %v206
    %v626 = vunpack.c.l.b16 %v207
    %v627 = vunpack.c.h.b16 %v207
    %v628 = vunpack.c.l.b16 %v208
    %v629 = vunpack.c.h.b16 %v208
    %v630 = vunpack.c.l.b16 %v209
    %v631 = vunpack.c.h.b16 %v209
    %v632 = vunpack.c.l.b16 %v210
    %v633 = vunpack.c.h.b16 %v210
    %v634 = vunpack.c.l.b16 %v211
    %v635 = vunpack.c.h.b16 %v211
    %v636 = vunpack.c.l.b16 %v212
    %v637 = vunpack.c.h.b16 %v212
    %v638 = vunpack.c.l.b16 %v213
    %v639 = vunpack.c.h.b16 %v213
    %v640 = vunpack.c.l.b16 %v214
    %v641 = vunpack.c.h.b16 %v214
    %v642 = vunpack.c.l.b16 %v215
    %v643 = vunpack.c.h.b16 %v215
    %v644 = vunpack.c.l.b16 %v216
    %v645 = vunpack.c.h.b16 %v216
    %v646 = vunpack.c.l.b16 %v217
    %v647 = vunpack.c.h.b16 %v217
    %v648 = vpack.c.b16 %v394, %v392
    %v649 = vpack.c.b16 %v395, %v393
    %v650 = vpack.c.b16 %v398, %v396
    %v651 = vpack.c.b16 %v399, %v397
    %v652 = vpack.c.b16 %v402, %v400
    %v653 = vpack.c.b16 %v403, %v401
    %v654 = vpack.c.b16 %v406, %v404
    %v655 = vpack.c.b16 %v407, %v405
    %v656 = vpack.c.b16 %v410, %v408
    %v657 = vpack.c.b16 %v411, %v409
    %v658 = vpack.c.b16 %v414, %v412
    %v659 = vpack.c.b16 %v415, %v413
    %v660 = vpack.c.b16 %v418, %v416
    %v661 = vpack.c.b16 %v419, %v417
    %v662 = vpack.c.b16 %v422, %v420
    %v663 = vpack.c.b16 %v423, %v421
    %v664 = vpack.c.b16 %v426, %v424
    %v665 = vpack.c.b16 %v427, %v425
    %v666 = vpack.c.b16 %v430, %v428
    %v667 = vpack.c.b16 %v431, %v429
    %v668 = vpack.c.b16 %v434, %v432
    %v669 = vpack.c.b16 %v435, %v433
    %v670 = vpack.c.b16 %v438, %v436
    %v671 = vpack.c.b16 %v439, %v437
    %v672 = vpack.c.b16 %v442, %v440
    %v673 = vpack.c.b16 %v443, %v441
    %v674 = vpack.c.b16 %v446, %v444
    %v675 = vpack.c.b16 %v447, %v445
    %v676 = vpack.c.b16 %v450, %v448
    %v677 = vpack.c.b16 %v451, %v449
    %v678 = vpack.c.b16 %v454, %v452
    %v679 = vpack.c.b16 %v455, %v453
    %v680 = vpack.c.b16 %v458, %v456
    %v681 = vpack.c.b16 %v459, %v457
    %v682 = vpack.c.b16 %v462, %v460
    %v683 = vpack.c.b16 %v463, %v461
    %v684 = vpack.c.b16 %v466, %v464
    %v685 = vpack.c.b16 %v467, %v465
    %v686 = vpack.c.b16 %v470, %v468
    %v687 = vpack.c.b16 %v471, %v469
    %v688 = vpack.c.b16 %v474, %v472
    %v689 = vpack.c.b16 %v475, %v473
    %v690 = vpack.c.b16 %v478, %v476
    %v691 = vpack.c.b16 %v479, %v477
    %v692 = vpack.c.b16 %v482, %v480
    %v693 = vpack.c.b16 %v483, %v481
    %v694 = vpack.c.b16 %v486, %v484
    %v695 = vpack.c.b16 %v487, %v485
    %v696 = vpack.c.b16 %v490, %v488
    %v697 = vpack.c.b16 %v491, %v489
    %v698 = vpack.c.b16 %v494, %v492
    %v699 = vpack.c.b16 %v495, %v493
    %v700 = vpack.c.b16 %v498, %v496
    %v701 = vpack.c.b16 %v499, %v497
    %v702 = vpack.c.b16 %v502, %v500
    %v703 = vpack.c.b16 %v503, %v501
    %v704 = vpack.c.b16 %v506, %v504
    %v705 = vpack.c.b16 %v507, %v505
    %v706 = vpack.c.b16 %v510, %v508
    %v707 = vpack.c.b16 %v511, %v509
    %v708 = vpack.c.b16 %v514, %v512
    %v709 = vpack.c.b16 %v515, %v513
    %v710 = vpack.c.b16 %v518, %v516
    %v711 = vpack.c.b16 %v519, %v517
    %v712 = vpack.c.b16 %v522, %v520
    %v713 = vpack.c.b16 %v523, %v521
    %v714 = vpack.c.b16 %v526, %v524
    %v715 = vpack.c.b16 %v527, %v525
    %v716 = vpack.c.b16 %v530, %v528
    %v717 = vpack.c.b16 %v531, %v529
    %v718 = vpack.c.b16 %v534, %v532
    %v719 = vpack.c.b16 %v535, %v533
    %v720 = vpack.c.b16 %v538, %v536
    %v721 = vpack.c.b16 %v539, %v537
    %v722 = vpack.c.b16 %v542, %v540
    %v723 = vpack.c.b16 %v543, %v541
    %v724 = vpack.c.b16 %v546, %v544
    %v725 = vpack.c.b16 %v547, %v545
    %v726 = vpack.c.b16 %v550, %v548
    %v727 = vpack.c.b16 %v551, %v549
    %v728 = vpack.c.b16 %v554, %v552
    %v729 = vpack.c.b16 %v555, %v553
    %v730 = vpack.c.b16 %v558, %v556
    %v731 = vpack.c.b16 %v559, %v557
    %v732 = vpack.c.b16 %v562, %v560
    %v733 = vpack.c.b16 %v563, %v561
    %v734 = vpack.c.b16 %v566, %v564
    %v735 = vpack.c.b16 %v567, %v565
    %v736 = vpack.c.b16 %v570, %v568
    %v737 = vpack.c.b16 %v571, %v569
    %v738 = vpack.c.b16 %v574, %v572
    %v739 = vpack.c.b16 %v575, %v573
    %v740 = vpack.c.b16 %v578, %v576
    %v741 = vpack.c.b16 %v579, %v577
    %v742 = vpack.c.b16 %v582, %v580
    %v743 = vpack.c.b16 %v583, %v581
    %v744 = vpack.c.b16 %v586, %v584
    %v745 = vpack.c.b16 %v587, %v585
    %v746 = vpack.c.b16 %v590, %v588
    %v747 = vpack.c.b16 %v591, %v589
    %v748 = vpack.c.b16 %v594, %v592
    %v749 = vpack.c.b16 %v595, %v593
    %v750 = vpack.c.b16 %v598, %v596
    %v751 = vpack.c.b16 %v599, %v597
    %v752 = vpack.c.b16 %v602, %v600
    %v753 = vpack.c.b16 %v603, %v601
    %v754 = vpack.c.b16 %v606, %v604
    %v755 = vpack.c.b16 %v607, %v605
    %v756 = vpack.c.b16 %v610, %v608
    %v757 = vpack.c.b16 %v611, %v609
    %v758 = vpack.c.b16 %v614, %v612
    %v759 = vpack.c.b16 %v615, %v613
    %v760 = vpack.c.b16 %v618, %v616
    %v761 = vpack.c.b16 %v619, %v617
    %v762 = vpack.c.b16 %v622, %v620
    %v763 = vpack.c.b16 %v623, %v621
    %v764 = vpack.c.b16 %v626, %v624
    %v765 = vpack.c.b16 %v627, %v625
    %v766 = vpack.c.b16 %v630, %v628
    %v767 = vpack.c.b16 %v631, %v629
    %v768 = vpack.c.b16 %v634, %v632
    %v769 = vpack.c.b16 %v635, %v633
    %v770 = vpack.c.b16 %v638, %v636
    %v771 = vpack.c.b16 %v639, %v637
    %v772 = vpack.c.b16 %v642, %v640
    %v773 = vpack.c.b16 %v643, %v641
    %v774 = vpack.c.b16 %v646, %v644
    %v775 = vpack.c.b16 %v647, %v645
    %904 = vmatpush.bf16.msra.mxu0 %v662
    %905 = vmatpush.bf16.msra.mxu0 %v660
    %906 = vmatpush.bf16.msra.mxu0 %v658
    %907 = vmatpush.bf16.msra.mxu0 %v656
    %908 = vmatpush.bf16.msra.mxu0 %v654
    %909 = vmatpush.bf16.msra.mxu0 %v652
    %910 = vmatpush.bf16.msra.mxu0 %v650
    %911 = vmatpush.bf16.msra.mxu0 %v648
    %912 = vmatmul.bf16.gmra.mxu0 %v248
    %v913 = vpop.f32.mrf.mxu0
    %v914 = vadd.f32 %v220, %v913
    %v915 = vpop.f32.mrf.mxu0
    %v916 = vadd.f32 %v220, %v915
    %917 = vdwg.mxu0
    %918 = vmatpush.bf16.msra.mxu0 %v678
    %919 = vmatpush.bf16.msra.mxu0 %v676
    %920 = vmatpush.bf16.msra.mxu0 %v674
    %921 = vmatpush.bf16.msra.mxu0 %v672
    %922 = vmatpush.bf16.msra.mxu0 %v670
    %923 = vmatpush.bf16.msra.mxu0 %v668
    %924 = vmatpush.bf16.msra.mxu0 %v666
    %925 = vmatpush.bf16.msra.mxu0 %v664
    %926 = vmatmul.bf16.gmra.mxu0 %v249
    %v927 = vpop.f32.mrf.mxu0
    %v928 = vadd.f32 %v914, %v927
    %v929 = vpop.f32.mrf.mxu0
    %v930 = vadd.f32 %v916, %v929
    %931 = vdwg.mxu0
    %932 = vmatpush.bf16.msra.mxu0 %v694
    %933 = vmatpush.bf16.msra.mxu0 %v692
    %934 = vmatpush.bf16.msra.mxu0 %v690
    %935 = vmatpush.bf16.msra.mxu0 %v688
    %936 = vmatpush.bf16.msra.mxu0 %v686
    %937 = vmatpush.bf16.msra.mxu0 %v684
    %938 = vmatpush.bf16.msra.mxu0 %v682
    %939 = vmatpush.bf16.msra.mxu0 %v680
    %940 = vmatmul.bf16.gmra.mxu0 %v250
    %v941 = vpop.f32.mrf.mxu0
    %v942 = vadd.f32 %v928, %v941
    %v943 = vpop.f32.mrf.mxu0
    %v944 = vadd.f32 %v930, %v943
    %945 = vdwg.mxu0
    %946 = vmatpush.bf16.msra.mxu0 %v710
    %947 = vmatpush.bf16.msra.mxu0 %v708
    %948 = vmatpush.bf16.msra.mxu0 %v706
    %949 = vmatpush.bf16.msra.mxu0 %v704
    %950 = vmatpush.bf16.msra.mxu0 %v702
    %951 = vmatpush.bf16.msra.mxu0 %v700
    %952 = vmatpush.bf16.msra.mxu0 %v698
    %953 = vmatpush.bf16.msra.mxu0 %v696
    %954 = vmatmul.bf16.gmra.mxu0 %v251
    %v955 = vpop.f32.mrf.mxu0
    %v956 = vadd.f32 %v942, %v955
    %v957 = vpop.f32.mrf.mxu0
    %v958 = vadd.f32 %v944, %v957
    %959 = vdwg.mxu0
    %960 = vmatpush.bf16.msra.mxu0 %v726
    %961 = vmatpush.bf16.msra.mxu0 %v724
    %962 = vmatpush.bf16.msra.mxu0 %v722
    %963 = vmatpush.bf16.msra.mxu0 %v720
    %964 = vmatpush.bf16.msra.mxu0 %v718
    %965 = vmatpush.bf16.msra.mxu0 %v716
    %966 = vmatpush.bf16.msra.mxu0 %v714
    %967 = vmatpush.bf16.msra.mxu0 %v712
    %968 = vmatmul.bf16.gmra.mxu0 %v252
    %v969 = vpop.f32.mrf.mxu0
    %v970 = vadd.f32 %v956, %v969
    %v971 = vpop.f32.mrf.mxu0
    %v972 = vadd.f32 %v958, %v971
    %973 = vdwg.mxu0
    %974 = vmatpush.bf16.msra.mxu0 %v742
    %975 = vmatpush.bf16.msra.mxu0 %v740
    %976 = vmatpush.bf16.msra.mxu0 %v738
    %977 = vmatpush.bf16.msra.mxu0 %v736
    %978 = vmatpush.bf16.msra.mxu0 %v734
    %979 = vmatpush.bf16.msra.mxu0 %v732
    %980 = vmatpush.bf16.msra.mxu0 %v730
    %981 = vmatpush.bf16.msra.mxu0 %v728
    %982 = vmatmul.bf16.gmra.mxu0 %v253
    %v983 = vpop.f32.mrf.mxu0
    %v984 = vadd.f32 %v970, %v983
    %v985 = vpop.f32.mrf.mxu0
    %v986 = vadd.f32 %v972, %v985
    %987 = vdwg.mxu0
    %988 = vmatpush.bf16.msra.mxu0 %v758
    %989 = vmatpush.bf16.msra.mxu0 %v756
    %990 = vmatpush.bf16.msra.mxu0 %v754
    %991 = vmatpush.bf16.msra.mxu0 %v752
    %992 = vmatpush.bf16.msra.mxu0 %v750
    %993 = vmatpush.bf16.msra.mxu0 %v748
    %994 = vmatpush.bf16.msra.mxu0 %v746
    %995 = vmatpush.bf16.msra.mxu0 %v744
    %996 = vmatmul.bf16.gmra.mxu0 %v254
    %v997 = vpop.f32.mrf.mxu0
    %v998 = vadd.f32 %v984, %v997
    %v999 = vpop.f32.mrf.mxu0
    %v1000 = vadd.f32 %v986, %v999
    %1001 = vdwg.mxu0
    %1002 = vmatpush.bf16.msra.mxu0 %v774
    %1003 = vmatpush.bf16.msra.mxu0 %v772
    %1004 = vmatpush.bf16.msra.mxu0 %v770
    %1005 = vmatpush.bf16.msra.mxu0 %v768
    %1006 = vmatpush.bf16.msra.mxu0 %v766
    %1007 = vmatpush.bf16.msra.mxu0 %v764
    %1008 = vmatpush.bf16.msra.mxu0 %v762
    %1009 = vmatpush.bf16.msra.mxu0 %v760
    %1010 = vmatmul.bf16.gmra.mxu0 %v255
    %v1011 = vpop.f32.mrf.mxu0
    %v1012 = vadd.f32 %v998, %v1011
    %v1013 = vpop.f32.mrf.mxu0
    %v1014 = vadd.f32 %v1000, %v1013
    %1015 = vdwg.mxu0
    %1016 = vmatpush.bf16.msra.mxu0 %v663
    %1017 = vmatpush.bf16.msra.mxu0 %v661
    %1018 = vmatpush.bf16.msra.mxu0 %v659
    %1019 = vmatpush.bf16.msra.mxu0 %v657
    %1020 = vmatpush.bf16.msra.mxu0 %v655
    %1021 = vmatpush.bf16.msra.mxu0 %v653
    %1022 = vmatpush.bf16.msra.mxu0 %v651
    %1023 = vmatpush.bf16.msra.mxu0 %v649
    %1024 = vmatmul.bf16.gmra.mxu0 %v248
    %v1025 = vpop.f32.mrf.mxu0
    %v1026 = vadd.f32 %v221, %v1025
    %v1027 = vpop.f32.mrf.mxu0
    %v1028 = vadd.f32 %v221, %v1027
    %1029 = vdwg.mxu0
    %1030 = vmatpush.bf16.msra.mxu0 %v679
    %1031 = vmatpush.bf16.msra.mxu0 %v677
    %1032 = vmatpush.bf16.msra.mxu0 %v675
    %1033 = vmatpush.bf16.msra.mxu0 %v673
    %1034 = vmatpush.bf16.msra.mxu0 %v671
    %1035 = vmatpush.bf16.msra.mxu0 %v669
    %1036 = vmatpush.bf16.msra.mxu0 %v667
    %1037 = vmatpush.bf16.msra.mxu0 %v665
    %1038 = vmatmul.bf16.gmra.mxu0 %v249
    %v1039 = vpop.f32.mrf.mxu0
    %v1040 = vadd.f32 %v1026, %v1039
    %v1041 = vpop.f32.mrf.mxu0
    %v1042 = vadd.f32 %v1028, %v1041
    %1043 = vdwg.mxu0
    %1044 = vmatpush.bf16.msra.mxu0 %v695
    %1045 = vmatpush.bf16.msra.mxu0 %v693
    %1046 = vmatpush.bf16.msra.mxu0 %v691
    %1047 = vmatpush.bf16.msra.mxu0 %v689
    %1048 = vmatpush.bf16.msra.mxu0 %v687
    %1049 = vmatpush.bf16.msra.mxu0 %v685
    %1050 = vmatpush.bf16.msra.mxu0 %v683
    %1051 = vmatpush.bf16.msra.mxu0 %v681
    %1052 = vmatmul.bf16.gmra.mxu0 %v250
    %v1053 = vpop.f32.mrf.mxu0
    %v1054 = vadd.f32 %v1040, %v1053
    %v1055 = vpop.f32.mrf.mxu0
    %v1056 = vadd.f32 %v1042, %v1055
    %1057 = vdwg.mxu0
    %1058 = vmatpush.bf16.msra.mxu0 %v711
    %1059 = vmatpush.bf16.msra.mxu0 %v709
    %1060 = vmatpush.bf16.msra.mxu0 %v707
    %1061 = vmatpush.bf16.msra.mxu0 %v705
    %1062 = vmatpush.bf16.msra.mxu0 %v703
    %1063 = vmatpush.bf16.msra.mxu0 %v701
    %1064 = vmatpush.bf16.msra.mxu0 %v699
    %1065 = vmatpush.bf16.msra.mxu0 %v697
    %1066 = vmatmul.bf16.gmra.mxu0 %v251
    %v1067 = vpop.f32.mrf.mxu0
    %v1068 = vadd.f32 %v1054, %v1067
    %v1069 = vpop.f32.mrf.mxu0
    %v1070 = vadd.f32 %v1056, %v1069
    %1071 = vdwg.mxu0
    %1072 = vmatpush.bf16.msra.mxu0 %v727
    %1073 = vmatpush.bf16.msra.mxu0 %v725
    %1074 = vmatpush.bf16.msra.mxu0 %v723
    %1075 = vmatpush.bf16.msra.mxu0 %v721
    %1076 = vmatpush.bf16.msra.mxu0 %v719
    %1077 = vmatpush.bf16.msra.mxu0 %v717
    %1078 = vmatpush.bf16.msra.mxu0 %v715
    %1079 = vmatpush.bf16.msra.mxu0 %v713
    %1080 = vmatmul.bf16.gmra.mxu0 %v252
    %v1081 = vpop.f32.mrf.mxu0
    %v1082 = vadd.f32 %v1068, %v1081
    %v1083 = vpop.f32.mrf.mxu0
    %v1084 = vadd.f32 %v1070, %v1083
    %1085 = vdwg.mxu0
    %1086 = vmatpush.bf16.msra.mxu0 %v743
    %1087 = vmatpush.bf16.msra.mxu0 %v741
    %1088 = vmatpush.bf16.msra.mxu0 %v739
    %1089 = vmatpush.bf16.msra.mxu0 %v737
    %1090 = vmatpush.bf16.msra.mxu0 %v735
    %1091 = vmatpush.bf16.msra.mxu0 %v733
    %1092 = vmatpush.bf16.msra.mxu0 %v731
    %1093 = vmatpush.bf16.msra.mxu0 %v729
    %1094 = vmatmul.bf16.gmra.mxu0 %v253
    %v1095 = vpop.f32.mrf.mxu0
    %v1096 = vadd.f32 %v1082, %v1095
    %v1097 = vpop.f32.mrf.mxu0
    %v1098 = vadd.f32 %v1084, %v1097
    %1099 = vdwg.mxu0
    %1100 = vmatpush.bf16.msra.mxu0 %v759
    %1101 = vmatpush.bf16.msra.mxu0 %v757
    %1102 = vmatpush.bf16.msra.mxu0 %v755
    %1103 = vmatpush.bf16.msra.mxu0 %v753
    %1104 = vmatpush.bf16.msra.mxu0 %v751
    %1105 = vmatpush.bf16.msra.mxu0 %v749
    %1106 = vmatpush.bf16.msra.mxu0 %v747
    %1107 = vmatpush.bf16.msra.mxu0 %v745
    %1108 = vmatmul.bf16.gmra.mxu0 %v254
    %v1109 = vpop.f32.mrf.mxu0
    %v1110 = vadd.f32 %v1096, %v1109
    %v1111 = vpop.f32.mrf.mxu0
    %v1112 = vadd.f32 %v1098, %v1111
    %1113 = vdwg.mxu0
    %1114 = vmatpush.bf16.msra.mxu0 %v775
    %1115 = vmatpush.bf16.msra.mxu0 %v773
    %1116 = vmatpush.bf16.msra.mxu0 %v771
    %1117 = vmatpush.bf16.msra.mxu0 %v769
    %1118 = vmatpush.bf16.msra.mxu0 %v767
    %1119 = vmatpush.bf16.msra.mxu0 %v765
    %1120 = vmatpush.bf16.msra.mxu0 %v763
    %1121 = vmatpush.bf16.msra.mxu0 %v761
    %1122 = vmatmul.bf16.gmra.mxu0 %v255
    %v1123 = vpop.f32.mrf.mxu0
    %v1124 = vadd.f32 %v1110, %v1123
    %v1125 = vpop.f32.mrf.mxu0
    %v1126 = vadd.f32 %v1112, %v1125
    %1127 = vdwg.mxu0
    %v1128 = vmax.f32 %v1012, 0.0
    %v1129 = vmax.f32 %v1124, 0.0
    %v1130 = vmax.f32 %v1014, 0.0
    %v1131 = vmax.f32 %v1126, 0.0
    %v1132 = vpack.c.bf16 %v1130, %v1128
    %v1133 = vpack.c.bf16 %v1131, %v1129
    %v1134 = vld [vmem:[#allocation8] sm:$0xff]
    %v1135 = vld [vmem:[#allocation8 + $0x8] sm:$0xff]
    %v1136 = vld [vmem:[#allocation8 + $0x10] sm:$0xff]
    %v1137 = vld [vmem:[#allocation8 + $0x18] sm:$0xff]
    %v1138 = vld [vmem:[#allocation8 + $0x20] sm:$0xff]
    %v1139 = vld [vmem:[#allocation8 + $0x28] sm:$0xff]
    %v1140 = vld [vmem:[#allocation8 + $0x30] sm:$0xff]
    %v1141 = vld [vmem:[#allocation8 + $0x38] sm:$0xff]
    %v1142 = vld [vmem:[#allocation8 + $0x40] sm:$0xff]
    %v1143 = vld [vmem:[#allocation8 + $0x48] sm:$0xff]
    %v1144 = vld [vmem:[#allocation8 + $0x50] sm:$0xff]
    %v1145 = vld [vmem:[#allocation8 + $0x58] sm:$0xff]
    %v1146 = vld [vmem:[#allocation8 + $0x60] sm:$0xff]
    %v1147 = vld [vmem:[#allocation8 + $0x68] sm:$0xff]
    %v1148 = vld [vmem:[#allocation8 + $0x70] sm:$0xff]
    %v1149 = vld [vmem:[#allocation8 + $0x78] sm:$0xff]
    %v1150 = vld [vmem:[#allocation8 + $0x80] sm:$0xff]
    %v1151 = vld [vmem:[#allocation8 + $0x88] sm:$0xff]
    %v1152 = vld [vmem:[#allocation8 + $0x90] sm:$0xff]
    %v1153 = vld [vmem:[#allocation8 + $0x98] sm:$0xff]
    %v1154 = vld [vmem:[#allocation8 + $0xa0] sm:$0xff]
    %v1155 = vld [vmem:[#allocation8 + $0xa8] sm:$0xff]
    %v1156 = vld [vmem:[#allocation8 + $0xb0] sm:$0xff]
    %v1157 = vld [vmem:[#allocation8 + $0xb8] sm:$0xff]
    %v1158 = vld [vmem:[#allocation8 + $0xc0] sm:$0xff]
    %v1159 = vld [vmem:[#allocation8 + $0xc8] sm:$0xff]
    %v1160 = vld [vmem:[#allocation8 + $0xd0] sm:$0xff]
    %v1161 = vld [vmem:[#allocation8 + $0xd8] sm:$0xff]
    %v1162 = vld [vmem:[#allocation8 + $0xe0] sm:$0xff]
    %v1163 = vld [vmem:[#allocation8 + $0xe8] sm:$0xff]
    %v1164 = vld [vmem:[#allocation8 + $0xf0] sm:$0xff]
    %v1165 = vld [vmem:[#allocation8 + $0xf8] sm:$0xff]
    %v1166 = vld [vmem:[%s4] sm:$0x3]
    %v1168 = vperm.slane %v1166, 0
    %v1169 = vperm.slane %v1166, 1
    %v1204 = vunpack.c.l.b16 %v1134
    %v1205 = vunpack.c.h.b16 %v1134
    %v1206 = vunpack.c.l.b16 %v1135
    %v1207 = vunpack.c.h.b16 %v1135
    %v1208 = vunpack.c.l.b16 %v1136
    %v1209 = vunpack.c.h.b16 %v1136
    %v1210 = vunpack.c.l.b16 %v1137
    %v1211 = vunpack.c.h.b16 %v1137
    %v1212 = vunpack.c.l.b16 %v1138
    %v1213 = vunpack.c.h.b16 %v1138
    %v1214 = vunpack.c.l.b16 %v1139
    %v1215 = vunpack.c.h.b16 %v1139
    %v1216 = vunpack.c.l.b16 %v1140
    %v1217 = vunpack.c.h.b16 %v1140
    %v1218 = vunpack.c.l.b16 %v1141
    %v1219 = vunpack.c.h.b16 %v1141
    %v1220 = vunpack.c.l.b16 %v1142
    %v1221 = vunpack.c.h.b16 %v1142
    %v1222 = vunpack.c.l.b16 %v1143
    %v1223 = vunpack.c.h.b16 %v1143
    %v1224 = vunpack.c.l.b16 %v1144
    %v1225 = vunpack.c.h.b16 %v1144
    %v1226 = vunpack.c.l.b16 %v1145
    %v1227 = vunpack.c.h.b16 %v1145
    %v1228 = vunpack.c.l.b16 %v1146
    %v1229 = vunpack.c.h.b16 %v1146
    %v1230 = vunpack.c.l.b16 %v1147
    %v1231 = vunpack.c.h.b16 %v1147
    %v1232 = vunpack.c.l.b16 %v1148
    %v1233 = vunpack.c.h.b16 %v1148
    %v1234 = vunpack.c.l.b16 %v1149
    %v1235 = vunpack.c.h.b16 %v1149
    %v1236 = vunpack.c.l.b16 %v1150
    %v1237 = vunpack.c.h.b16 %v1150
    %v1238 = vunpack.c.l.b16 %v1151
    %v1239 = vunpack.c.h.b16 %v1151
    %v1240 = vunpack.c.l.b16 %v1152
    %v1241 = vunpack.c.h.b16 %v1152
    %v1242 = vunpack.c.l.b16 %v1153
    %v1243 = vunpack.c.h.b16 %v1153
    %v1244 = vunpack.c.l.b16 %v1154
    %v1245 = vunpack.c.h.b16 %v1154
    %v1246 = vunpack.c.l.b16 %v1155
    %v1247 = vunpack.c.h.b16 %v1155
    %v1248 = vunpack.c.l.b16 %v1156
    %v1249 = vunpack.c.h.b16 %v1156
    %v1250 = vunpack.c.l.b16 %v1157
    %v1251 = vunpack.c.h.b16 %v1157
    %v1252 = vunpack.c.l.b16 %v1158
    %v1253 = vunpack.c.h.b16 %v1158
    %v1254 = vunpack.c.l.b16 %v1159
    %v1255 = vunpack.c.h.b16 %v1159
    %v1256 = vunpack.c.l.b16 %v1160
    %v1257 = vunpack.c.h.b16 %v1160
    %v1258 = vunpack.c.l.b16 %v1161
    %v1259 = vunpack.c.h.b16 %v1161
    %v1260 = vunpack.c.l.b16 %v1162
    %v1261 = vunpack.c.h.b16 %v1162
    %v1262 = vunpack.c.l.b16 %v1163
    %v1263 = vunpack.c.h.b16 %v1163
    %v1264 = vunpack.c.l.b16 %v1164
    %v1265 = vunpack.c.h.b16 %v1164
    %v1266 = vunpack.c.l.b16 %v1165
    %v1267 = vunpack.c.h.b16 %v1165
    %v1268 = vpack.c.b16 %v1206, %v1204
    %v1269 = vpack.c.b16 %v1207, %v1205
    %v1270 = vpack.c.b16 %v1210, %v1208
    %v1271 = vpack.c.b16 %v1211, %v1209
    %v1272 = vpack.c.b16 %v1214, %v1212
    %v1273 = vpack.c.b16 %v1215, %v1213
    %v1274 = vpack.c.b16 %v1218, %v1216
    %v1275 = vpack.c.b16 %v1219, %v1217
    %v1276 = vpack.c.b16 %v1222, %v1220
    %v1277 = vpack.c.b16 %v1223, %v1221
    %v1278 = vpack.c.b16 %v1226, %v1224
    %v1279 = vpack.c.b16 %v1227, %v1225
    %v1280 = vpack.c.b16 %v1230, %v1228
    %v1281 = vpack.c.b16 %v1231, %v1229
    %v1282 = vpack.c.b16 %v1234, %v1232
    %v1283 = vpack.c.b16 %v1235, %v1233
    %v1284 = vpack.c.b16 %v1238, %v1236
    %v1285 = vpack.c.b16 %v1239, %v1237
    %v1286 = vpack.c.b16 %v1242, %v1240
    %v1287 = vpack.c.b16 %v1243, %v1241
    %v1288 = vpack.c.b16 %v1246, %v1244
    %v1289 = vpack.c.b16 %v1247, %v1245
    %v1290 = vpack.c.b16 %v1250, %v1248
    %v1291 = vpack.c.b16 %v1251, %v1249
    %v1292 = vpack.c.b16 %v1254, %v1252
    %v1293 = vpack.c.b16 %v1255, %v1253
    %v1294 = vpack.c.b16 %v1258, %v1256
    %v1295 = vpack.c.b16 %v1259, %v1257
    %v1296 = vpack.c.b16 %v1262, %v1260
    %v1297 = vpack.c.b16 %v1263, %v1261
    %v1298 = vpack.c.b16 %v1266, %v1264
    %v1299 = vpack.c.b16 %v1267, %v1265
    %1332 = vmatpush.bf16.msra.mxu0 %v1282
    %1333 = vmatpush.bf16.msra.mxu0 %v1280
    %1334 = vmatpush.bf16.msra.mxu0 %v1278
    %1335 = vmatpush.bf16.msra.mxu0 %v1276
    %1336 = vmatpush.bf16.msra.mxu0 %v1274
    %1337 = vmatpush.bf16.msra.mxu0 %v1272
    %1338 = vmatpush.bf16.msra.mxu0 %v1270
    %1339 = vmatpush.bf16.msra.mxu0 %v1268
    %1340 = vmatmul.bf16.gmra.mxu0 %v1132
    %v1341 = vpop.f32.mrf.mxu0
    %v1342 = vadd.f32 %v1168, %v1341
    %v1343 = vpop.f32.mrf.mxu0
    %v1344 = vadd.f32 %v1168, %v1343
    %1345 = vdwg.mxu0
    %1346 = vmatpush.bf16.msra.mxu0 %v1298
    %1347 = vmatpush.bf16.msra.mxu0 %v1296
    %1348 = vmatpush.bf16.msra.mxu0 %v1294
    %1349 = vmatpush.bf16.msra.mxu0 %v1292
    %1350 = vmatpush.bf16.msra.mxu0 %v1290
    %1351 = vmatpush.bf16.msra.mxu0 %v1288
    %1352 = vmatpush.bf16.msra.mxu0 %v1286
    %1353 = vmatpush.bf16.msra.mxu0 %v1284
    %1354 = vmatmul.bf16.gmra.mxu0 %v1133
    %v1355 = vpop.f32.mrf.mxu0
    %v1356 = vadd.f32 %v1342, %v1355
    %v1357 = vpop.f32.mrf.mxu0
    %v1358 = vadd.f32 %v1344, %v1357
    %1359 = vdwg.mxu0
    %1360 = vmatpush.bf16.msra.mxu0 %v1283
    %1361 = vmatpush.bf16.msra.mxu0 %v1281
    %1362 = vmatpush.bf16.msra.mxu0 %v1279
    %1363 = vmatpush.bf16.msra.mxu0 %v1277
    %1364 = vmatpush.bf16.msra.mxu0 %v1275
    %1365 = vmatpush.bf16.msra.mxu0 %v1273
    %1366 = vmatpush.bf16.msra.mxu0 %v1271
    %1367 = vmatpush.bf16.msra.mxu0 %v1269
    %1368 = vmatmul.bf16.gmra.mxu0 %v1132
    %v1369 = vpop.f32.mrf.mxu0
    %v1370 = vadd.f32 %v1169, %v1369
    %v1371 = vpop.f32.mrf.mxu0
    %v1372 = vadd.f32 %v1169, %v1371
    %1373 = vdwg.mxu0
    %1374 = vmatpush.bf16.msra.mxu0 %v1299
    %1375 = vmatpush.bf16.msra.mxu0 %v1297
    %1376 = vmatpush.bf16.msra.mxu0 %v1295
    %1377 = vmatpush.bf16.msra.mxu0 %v1293
    %1378 = vmatpush.bf16.msra.mxu0 %v1291
    %1379 = vmatpush.bf16.msra.mxu0 %v1289
    %1380 = vmatpush.bf16.msra.mxu0 %v1287
    %1381 = vmatpush.bf16.msra.mxu0 %v1285
    %1382 = vmatmul.bf16.gmra.mxu0 %v1133
    %v1383 = vpop.f32.mrf.mxu0
    %v1384 = vadd.f32 %v1370, %v1383
    %v1385 = vpop.f32.mrf.mxu0
    %v1386 = vadd.f32 %v1372, %v1385
    %1387 = vdwg.mxu0
    %1388 = vst [vmem:[#allocation10] sm:$0xff] %v1356
    %1389 = vst [vmem:[#allocation10 + $0x8] sm:$0xff] %v1384
    %1390 = vst [vmem:[#allocation10 + $0x10] sm:$0xff] %v1358
    %1391 = vst [vmem:[#allocation10 + $0x18] sm:$0xff] %v1386
    // Predicated region
    $region38: #{tpu_custom_call.1} parent=1 // pred_check
      _
    $region39: #{tpu_custom_call.1} parent=1 // pred_check_branch
      %1393 = sbr.rel (0) target = $region41
    $region40: #{tpu_custom_call.1} parent=1 // pred_region
      %1395 = vsyncadd [#allocation4], 0
      %s1396 = sshll.u32 [#allocation10], 4
      %s1397 = int_to_ptr.vmem [resolvable:$true] %s1396
      %s1398 = sshll.u32 %s5, 4
      %s1399 = int_to_ptr.hbm [resolvable:$true] %s1398
      %1404 = dma.vmem_to_hbm [thread:$0]  %s1397, 512, %s1399, [#allocation4], 256, 256, 16
    $region41: #{tpu_custom_call.1} parent=1 // pred_fallthru
      _
    // Predicated region
    $region42: #{tpu_custom_call.1} parent=1 // pred_check
      _
    $region43: #{tpu_custom_call.1} parent=1 // pred_check_branch
      %1406 = sbr.rel (0) target = $region45
    $region44: #{tpu_custom_call.1} parent=1 // pred_region
      %1408 = dma.done [#allocation4], 512
    $region45: #{tpu_custom_call.1} parent=1 // pred_fallthru
      _
    %1409 = vsyncpa [#allocation3], 1
    %1410 = vsyncpa [#allocation6], 1
    %1411 = vsyncpa [#allocation9], 1
    %1412 = vsyncpa [#allocation4], 1

</llo_original>
